<compile_context>
chip_gen: v5e
topology: v5e:2x2
jax: 0.10.0
libtpu: 0.0.40
codegen_flags: <defaults>
</compile_context>

<pallas_src>
import jax
import jax.numpy as jnp
from jax.experimental import pallas as pl
from jax.experimental.pallas import tpu as pltpu

N_BLADES = 8   # Cl(1,1,1) -> 2**3 blade components
LANE = 128


def _round_up(x, m):
    return ((x + m - 1) // m) * m


def _lfcdp_kernel(x_ref, wlr_ref, bias_ref, wo_ref, out_ref):
    """One batch tile.

    x_ref    : (TB, 8*C)        flattened multivectors (blade-major on lanes)
    wlr_ref  : (8*C, 2*8*H)     block-diagonal packed [W_l | W_r]
    bias_ref : (1, 2*8*H)       f32, nonzero only at blade-0 columns
    wo_ref   : (8*H, OUT_pad)   f32, W_out^T tiled over blades (folds blade sum)
    out_ref  : (TB, OUT_pad)    f32
    """
    hf = wo_ref.shape[0]  # 8*H

    # Single MXU matmul produces left and right projections for all 8 blades.
    lr = jnp.dot(x_ref[...], wlr_ref[...], preferred_element_type=jnp.float32)
    lr = lr + bias_ref[...]                     # blade-0 bias embedding

    # Bilinear form b(left, right) for metric (1,1,1): elementwise product;
    # the sum over blades is folded into wo_ref below.
    prod = lr[:, :hf] * lr[:, hf:]              # (TB, 8*H), f32

    out_ref[...] = jnp.dot(prod, wo_ref[...],
                           preferred_element_type=jnp.float32)


def linear_fully_connected_dot_product(vec, w_left, b_left, w_right, b_right,
                                        w_out, *, block_b=512,
                                        compute_dtype=jnp.bfloat16):
    """vec: (B, C_in, 8) multivectors (PyTorch axis order).

    Returns (B, out_scalar_dims) float32.
    """
    B, C, nb = vec.shape
    assert nb == N_BLADES
    H = w_left.shape[0]
    OUT = w_out.shape[0]
    cf = N_BLADES * C          # flattened input width   (lanes)
    hf = N_BLADES * H          # flattened hidden width  (lanes)
    out_pad = _round_up(OUT, LANE)

    f32 = jnp.float32

    # ---- one-time weight packing (wrapper side) ---------------------------
    eye = jnp.eye(N_BLADES, dtype=f32)
    # wl_blk[i*C+c, j*H+h] = delta_ij * W_l[h, c]   (same channel mix per blade)
    wl_blk = jnp.einsum("ij,ch->icjh", eye, w_left.T.astype(f32)).reshape(cf, hf)
    wr_blk = jnp.einsum("ij,ch->icjh", eye, w_right.T.astype(f32)).reshape(cf, hf)
    wlr = jnp.concatenate([wl_blk, wr_blk], axis=1).astype(compute_dtype)

    # Bias row: only blade-0 columns of each half are nonzero.
    bias_lr = jnp.zeros((1, 2 * hf), f32)
    bias_lr = bias_lr.at[0, :H].set(b_left[0].astype(f32))
    bias_lr = bias_lr.at[0, hf:hf + H].set(b_right[0].astype(f32))

    # W_out^T tiled over blades folds the blade reduction into the 2nd matmul;
    # columns lane-padded to 128 so output stores are unmasked.
    wo_packed = jnp.tile(w_out.T.astype(f32), (N_BLADES, 1))      # (8H, OUT)
    wo_packed = jnp.pad(wo_packed, ((0, 0), (0, out_pad - OUT)))  # (8H, OUT_pad)

    # ---- input flattening: blades*channels onto the lane axis -------------
    x = jnp.transpose(vec, (0, 2, 1)).reshape(B, cf)              # (B, 8*C)
    tb = min(block_b, _round_up(B, 8))
    b_pad = _round_up(B, tb)
    x = jnp.pad(x, ((0, b_pad - B), (0, 0))).astype(compute_dtype)

    out = pl.pallas_call(
        _lfcdp_kernel,
        out_shape=jax.ShapeDtypeStruct((b_pad, out_pad), f32),
        grid=(b_pad // tb,),
        in_specs=[
            pl.BlockSpec((tb, cf), lambda b: (b, 0)),       # batch-tiled input
            pl.BlockSpec((cf, 2 * hf), lambda b: (0, 0)),   # VMEM-resident
            pl.BlockSpec((1, 2 * hf), lambda b: (0, 0)),    # VMEM-resident
            pl.BlockSpec((hf, out_pad), lambda b: (0, 0)),  # VMEM-resident
        ],
        out_specs=pl.BlockSpec((tb, out_pad), lambda b: (b, 0)),
        compiler_params=pltpu.CompilerParams(
            dimension_semantics=("parallel",)),
    )(x, wlr, bias_lr, wo_packed)

    return out[:B, :OUT]


def _reference(vec, w_left, b_left, w_right, b_right, w_out):
    # Pure-JAX mirror of the PyTorch forward.
    left = jnp.einsum("bmi,hm->bhi", vec, w_left)
    right = jnp.einsum("bmi,hm->bhi", vec, w_right)
    left = left.at[..., 0].add(b_left[0])
    right = right.at[..., 0].add(b_right[0])
    dot = jnp.sum(left * right, axis=-1)          # b(x, y), metric (1,1,1)
    return jnp.einsum("bh,oh->bo", dot, w_out)


if __name__ == "__main__":
    # Module config: in_vec_dims=4, hidden_vec_dims=32, in_scalar_dims=4
    # (unused in forward), out_scalar_dims=16.
    B, C_IN, HIDDEN, OUT = 2, 4, 32, 16

    key = jax.random.PRNGKey(0)
    k_x, k_wl, k_bl, k_wr, k_br, k_wo, k_x2 = jax.random.split(key, 7)

    w_left = 0.1 * jax.random.normal(k_wl, (HIDDEN, C_IN), dtype=jnp.float32)
    b_left = 0.1 * jax.random.normal(k_bl, (1, HIDDEN), dtype=jnp.float32)
    w_right = 0.1 * jax.random.normal(k_wr, (HIDDEN, C_IN), dtype=jnp.float32)
    b_right = 0.1 * jax.random.normal(k_br, (1, HIDDEN), dtype=jnp.float32)
    w_out = 0.1 * jax.random.normal(k_wo, (OUT, HIDDEN), dtype=jnp.float32)

    # Case 1: module-sized shapes, f32 path, tight tolerance.
    vec = jax.random.normal(k_x, (B, C_IN, N_BLADES), dtype=jnp.float32)
    out = linear_fully_connected_dot_product(
        vec, w_left, b_left, w_right, b_right, w_out,
        compute_dtype=jnp.float32)
    out = jax.block_until_ready(out)
    ref = _reference(vec, w_left, b_left, w_right, b_right, w_out)
    assert out.shape == (B, OUT)
    assert jnp.allclose(out, ref, atol=1e-4, rtol=1e-4)

    # Case 2: larger batch exercising the batch grid, tail padding and the
    # bf16 input stream (f32 MXU accumulation).
    B2 = 300
    vec2 = jax.random.normal(k_x2, (B2, C_IN, N_BLADES), dtype=jnp.float32)
    out2 = linear_fully_connected_dot_product(
        vec2, w_left, b_left, w_right, b_right, w_out,
        block_b=128, compute_dtype=jnp.bfloat16)
    out2 = jax.block_until_ready(out2)
    ref2 = _reference(vec2, w_left, b_left, w_right, b_right, w_out)
    assert out2.shape == (B2, OUT)
    assert jnp.allclose(out2, ref2, atol=5e-2, rtol=5e-2)

    print("KERNEL_OK")
</pallas_src>

<mosaic_0001>
module attributes {stable_mosaic.version = 11 : i64} {
  func.func @_lfcdp_kernel(%arg0: i32, %arg1: memref<8x32xf32, #tpu.memory_space<vmem>>, %arg2: memref<32x512xf32, #tpu.memory_space<vmem>>, %arg3: memref<1x512xf32, #tpu.memory_space<vmem>>, %arg4: memref<256x128xf32, #tpu.memory_space<vmem>>, %arg5: memref<8x128xf32, #tpu.memory_space<vmem>>) attributes {dimension_semantics = [#tpu.dimension_semantics<parallel>], iteration_bounds = array<i64: 1>, scalar_prefetch = 0 : i64, scratch_operands = 0 : i64, tpu.core_type = #tpu.core_type<tc>, window_params = [{transform_indices = @transform_0, window_bounds = array<i64: 8, 32>}, {pipeline_mode = #tpu.pipeline_mode<synchronous>, transform_indices = @transform_1, window_bounds = array<i64: 32, 512>}, {pipeline_mode = #tpu.pipeline_mode<synchronous>, transform_indices = @transform_2, window_bounds = array<i64: 1, 512>}, {pipeline_mode = #tpu.pipeline_mode<synchronous>, transform_indices = @transform_3, window_bounds = array<i64: 256, 128>}, {transform_indices = @transform_4, window_bounds = array<i64: 8, 128>}]} {
    %c0 = arith.constant 0 : index
    %c0_0 = arith.constant 0 : index
    %0 = vector.load %arg1[%c0, %c0_0] : memref<8x32xf32, #tpu.memory_space<vmem>>, vector<8x32xf32>
    %c0_1 = arith.constant 0 : index
    %c0_2 = arith.constant 0 : index
    %1 = vector.load %arg2[%c0_1, %c0_2] : memref<32x512xf32, #tpu.memory_space<vmem>>, vector<32x512xf32>
    %cst = arith.constant dense<0.000000e+00> : vector<8x512xf32>
    %2 = tpu.matmul %0, %1, %cst {dimension_numbers = #tpu.dot_dimension_numbers<[1], [0], [0], [1], [0, 0, 1, 1], [], []>} : vector<8x32xf32>, vector<32x512xf32>, vector<8x512xf32> -> vector<8x512xf32>
    %c0_3 = arith.constant 0 : index
    %c0_4 = arith.constant 0 : index
    %3 = vector.load %arg3[%c0_3, %c0_4] : memref<1x512xf32, #tpu.memory_space<vmem>>, vector<1x512xf32>
    %4 = vector.broadcast %3 : vector<1x512xf32> to vector<8x512xf32>
    %5 = arith.addf %2, %4 : vector<8x512xf32>
    %6 = vector.extract_strided_slice %5 {offsets = [0, 0], sizes = [8, 256], strides = [1, 1]} : vector<8x512xf32> to vector<8x256xf32>
    %7 = vector.extract_strided_slice %5 {offsets = [0, 256], sizes = [8, 256], strides = [1, 1]} : vector<8x512xf32> to vector<8x256xf32>
    %8 = arith.mulf %6, %7 : vector<8x256xf32>
    %c0_5 = arith.constant 0 : index
    %c0_6 = arith.constant 0 : index
    %9 = vector.load %arg4[%c0_5, %c0_6] : memref<256x128xf32, #tpu.memory_space<vmem>>, vector<256x128xf32>
    %cst_7 = arith.constant dense<0.000000e+00> : vector<8x128xf32>
    %10 = tpu.matmul %8, %9, %cst_7 {dimension_numbers = #tpu.dot_dimension_numbers<[1], [0], [0], [1], [0, 0, 1, 1], [], []>} : vector<8x256xf32>, vector<256x128xf32>, vector<8x128xf32> -> vector<8x128xf32>
    %c0_8 = arith.constant 0 : index
    %c0_9 = arith.constant 0 : index
    %11 = vector.load %arg5[%c0_8, %c0_9] : memref<8x128xf32, #tpu.memory_space<vmem>>, vector<8x128xf32>
    tpu.vector_store %arg5[%c0_8, %c0_9], %10 {strides = array<i32>} : memref<8x128xf32, #tpu.memory_space<vmem>>, vector<8x128xf32>,
    return
  }
  func.func @transform_0(%arg0: i32) -> (i32, i32) {
    %c0_i32 = arith.constant 0 : i32
    %c0_i32_0 = arith.constant 0 : i32
    return %arg0, %c0_i32 : i32, i32
  }
  func.func @transform_1(%arg0: i32) -> (i32, i32) {
    %c0_i32 = arith.constant 0 : i32
    %c0_i32_0 = arith.constant 0 : i32
    %c0_i32_1 = arith.constant 0 : i32
    return %c0_i32, %c0_i32_0 : i32, i32
  }
  func.func @transform_2(%arg0: i32) -> (i32, i32) {
    %c0_i32 = arith.constant 0 : i32
    %c0_i32_0 = arith.constant 0 : i32
    %c0_i32_1 = arith.constant 0 : i32
    return %c0_i32, %c0_i32_0 : i32, i32
  }
  func.func @transform_3(%arg0: i32) -> (i32, i32) {
    %c0_i32 = arith.constant 0 : i32
    %c0_i32_0 = arith.constant 0 : i32
    %c0_i32_1 = arith.constant 0 : i32
    return %c0_i32, %c0_i32_0 : i32, i32
  }
  func.func @transform_4(%arg0: i32) -> (i32, i32) {
    %c0_i32 = arith.constant 0 : i32
    %c0_i32_0 = arith.constant 0 : i32
    return %arg0, %c0_i32 : i32, i32
  }
}

</mosaic_0001>

<llo_original>
// kernel: tpu_custom_call.1
$region0: #{tpu_custom_call.1}
  #allocation0 [shape = 'u32[]', space=smem, size = 0x4, offset = 0x4, fixed_abs, tag = 'smem constant byte address 0x4 - core index']
  #allocation1 [shape = 'u32[72,128]{1,0:T(1,128)}', space=vmem, size = 0x9000, scoped, tag = 'internal scratch']
  %s0 = inlined_call_operand.hbm [shape: f32[8,32], index: 0, kind: input, shape index: {}]
  %s1 = inlined_call_operand.hbm [shape: f32[32,512], index: 1, kind: input, shape index: {}]
  %s2 = inlined_call_operand.hbm [shape: f32[1,512], index: 2, kind: input, shape index: {}]
  %s3 = inlined_call_operand.hbm [shape: f32[256,128], index: 3, kind: input, shape index: {}]
  %s4 = inlined_call_operand.hbm [shape: f32[8,128], index: 4, kind: output, shape index: {}]
  %s5 = sld [smem:[#allocation0]]
  $region42: #{tpu_custom_call.1} parent=0
    _
  %s7 = ssub.s32 1, %s5
  %s8 = scalar_select 0, %s7, %s5
  $region1: #{tpu_custom_call.1} parent=0
    #allocation2 [shape = 'u8[4096]{0}', space=vmem, size = 0x1000, scoped, tag = 'input window, operand 0, single buffered']
    #allocation3 [shape = 's32[1]{0}', space=sflag, size = 0x4, scoped, tag = 'scoped memory for tpu_custom_call.1']
    #allocation4 [shape = 's32[1]{0}', space=sflag, size = 0x4, scoped, tag = 'scoped memory for tpu_custom_call.1']
    #allocation5 [shape = 'u8[65536]{0}', space=vmem, size = 0x10000, scoped, tag = 'input window, operand 1, single buffered']
    #allocation6 [shape = 's32[1]{0}', space=sflag, size = 0x4, scoped, tag = 'scoped memory for tpu_custom_call.1']
    #allocation7 [shape = 'u8[2048]{0}', space=vmem, size = 0x800, scoped, tag = 'input window, operand 2, single buffered']
    #allocation8 [shape = 'u8[131072]{0}', space=vmem, size = 0x20000, scoped, tag = 'input window, operand 3, single buffered']
    #allocation9 [shape = 's32[1]{0}', space=sflag, size = 0x4, scoped, tag = 'scoped memory for tpu_custom_call.1']
    #allocation10 [shape = 'u8[4096]{0}', space=vmem, size = 0x1000, scoped, tag = 'output window, operand 0, single buffered']
    %9 = vsyncpa [#allocation3], 0
    %10 = vsyncpa [#allocation6], 0
    %11 = vsyncpa [#allocation9], 0
    %12 = vsyncpa [#allocation4], 0
    // Predicated region
    $region2: #{tpu_custom_call.1} parent=1 // pred_check
      _
    $region3: #{tpu_custom_call.1} parent=1 // pred_check_branch
      %14 = sbr.rel (0) target = $region5
    $region4: #{tpu_custom_call.1} parent=1 // pred_region
      %16 = vsyncadd [#allocation3], 0
      %s18 = sshll.u32 %s0, 4
      %s19 = int_to_ptr.hbm [resolvable:$true] %s18
      %s20 = sshll.u32 [#allocation2], 4
      %s21 = int_to_ptr.vmem [resolvable:$true] %s20
      %23 = dma.hbm_to_vmem [thread:$0]  %s19, 128, %s21, [#allocation3]
    $region5: #{tpu_custom_call.1} parent=1 // pred_fallthru
      _
    // Predicated region
    $region6: #{tpu_custom_call.1} parent=1 // pred_check
      _
    $region7: #{tpu_custom_call.1} parent=1 // pred_check_branch
      %25 = sbr.rel (0) target = $region9
    $region8: #{tpu_custom_call.1} parent=1 // pred_region
      %27 = vsyncadd [#allocation6], 0
      %s28 = sshll.u32 %s1, 4
      %s29 = int_to_ptr.hbm [resolvable:$true] %s28
      %s30 = sshll.u32 [#allocation5], 4
      %s31 = int_to_ptr.vmem [resolvable:$true] %s30
      %36 = dma.hbm_to_vmem [thread:$0]  %s29, 2048, %s31, [#allocation6], 512, 512, 32
    $region9: #{tpu_custom_call.1} parent=1 // pred_fallthru
      _
    // Predicated region
    $region10: #{tpu_custom_call.1} parent=1 // pred_check
      _
    $region11: #{tpu_custom_call.1} parent=1 // pred_check_branch
      %38 = sbr.rel (0) target = $region13
    $region12: #{tpu_custom_call.1} parent=1 // pred_region
      %40 = vsyncadd [#allocation6], 0
      %s42 = sshll.u32 %s2, 4
      %s43 = int_to_ptr.hbm [resolvable:$true] %s42
      %s44 = sshll.u32 [#allocation7], 4
      %s45 = int_to_ptr.vmem [resolvable:$true] %s44
      %47 = dma.hbm_to_vmem [thread:$0]  %s43, 64, %s45, [#allocation6]
    $region13: #{tpu_custom_call.1} parent=1 // pred_fallthru
      _
    // Predicated region
    $region14: #{tpu_custom_call.1} parent=1 // pred_check
      _
    $region15: #{tpu_custom_call.1} parent=1 // pred_check_branch
      %49 = sbr.rel (0) target = $region17
    $region16: #{tpu_custom_call.1} parent=1 // pred_region
      %51 = vsyncadd [#allocation9], 0
      %s52 = sshll.u32 %s3, 4
      %s53 = int_to_ptr.hbm [resolvable:$true] %s52
      %s54 = sshll.u32 [#allocation8], 4
      %s55 = int_to_ptr.vmem [resolvable:$true] %s54
      %60 = dma.hbm_to_vmem [thread:$0]  %s53, 4096, %s55, [#allocation9], 128, 128, 8
    $region17: #{tpu_custom_call.1} parent=1 // pred_fallthru
      _
    // Predicated region
    $region18: #{tpu_custom_call.1} parent=1 // pred_check
      _
    $region19: #{tpu_custom_call.1} parent=1 // pred_check_branch
      %62 = sbr.rel (0) target = $region21
    $region20: #{tpu_custom_call.1} parent=1 // pred_region
      %64 = dma.done [#allocation3], 128
    $region21: #{tpu_custom_call.1} parent=1 // pred_fallthru
      _
    // Predicated region
    $region22: #{tpu_custom_call.1} parent=1 // pred_check
      _
    $region23: #{tpu_custom_call.1} parent=1 // pred_check_branch
      %66 = sbr.rel (0) target = $region25
    $region24: #{tpu_custom_call.1} parent=1 // pred_region
      %68 = dma.done [#allocation6], 2048
    $region25: #{tpu_custom_call.1} parent=1 // pred_fallthru
      _
    // Predicated region
    $region26: #{tpu_custom_call.1} parent=1 // pred_check
      _
    $region27: #{tpu_custom_call.1} parent=1 // pred_check_branch
      %70 = sbr.rel (0) target = $region29
    $region28: #{tpu_custom_call.1} parent=1 // pred_region
      %72 = dma.done [#allocation6], 64
    $region29: #{tpu_custom_call.1} parent=1 // pred_fallthru
      _
    // Predicated region
    $region30: #{tpu_custom_call.1} parent=1 // pred_check
      _
    $region31: #{tpu_custom_call.1} parent=1 // pred_check_branch
      %74 = sbr.rel (0) target = $region33
    $region32: #{tpu_custom_call.1} parent=1 // pred_region
      %76 = dma.done [#allocation9], 4096
    $region33: #{tpu_custom_call.1} parent=1 // pred_fallthru
      _
    %v77 = vld [vmem:[#allocation2] sm:$0xff]
    %v78 = vld [vmem:[#allocation5] sm:$0xff]
    %v79 = vld [vmem:[#allocation5 + $0x8] sm:$0xff]
    %v80 = vld [vmem:[#allocation5 + $0x10] sm:$0xff]
    %v81 = vld [vmem:[#allocation5 + $0x18] sm:$0xff]
    %v82 = vld [vmem:[#allocation5 + $0x20] sm:$0xff]
    %v83 = vld [vmem:[#allocation5 + $0x28] sm:$0xff]
    %v84 = vld [vmem:[#allocation5 + $0x30] sm:$0xff]
    %v85 = vld [vmem:[#allocation5 + $0x38] sm:$0xff]
    %v86 = vld [vmem:[#allocation5 + $0x40] sm:$0xff]
    %v87 = vld [vmem:[#allocation5 + $0x48] sm:$0xff]
    %v88 = vld [vmem:[#allocation5 + $0x50] sm:$0xff]
    %v89 = vld [vmem:[#allocation5 + $0x58] sm:$0xff]
    %v90 = vld [vmem:[#allocation5 + $0x60] sm:$0xff]
    %v91 = vld [vmem:[#allocation5 + $0x68] sm:$0xff]
    %v92 = vld [vmem:[#allocation5 + $0x70] sm:$0xff]
    %v93 = vld [vmem:[#allocation5 + $0x78] sm:$0xff]
    %v94 = vld [vmem:[#allocation7] sm:$0xf]
    %v96 = vperm.slane %v94, 0
    %v97 = vperm.slane %v94, 1
    %v98 = vperm.slane %v94, 2
    %v99 = vperm.slane %v94, 3
    %vm104 = vcmask 261120
    %v106 = vsel %vm104, %v77, 0
    %108 = vmatpush.msra.mxu0 0.0
    %109 = vmatpush.msra.mxu0 0.0
    %110 = vmatpush.msra.mxu0 0.0
    %111 = vmatpush.msra.mxu0 0.0
    %112 = vmatpush.msra.mxu0 0.0
    %113 = vmatpush.msra.mxu0 0.0
    %114 = vmatpush.msra.mxu0 0.0
    %115 = vmatpush.msra.mxu0 0.0
    %116 = vmatpush.msra.mxu0 0.0
    %117 = vmatpush.msra.mxu0 0.0
    %118 = vmatpush.msra.mxu0 0.0
    %119 = vmatpush.msra.mxu0 0.0
    %120 = vmatpush.msra.mxu0 %v90
    %121 = vmatpush.msra.mxu0 %v86
    %122 = vmatpush.msra.mxu0 %v82
    %123 = vmatpush.msra.mxu0 %v78
    %124 = vmatmul.f32.gmra.mxu0 %v106
    %v125 = vpop.f32.mrf.mxu0
    %v126 = vadd.f32 %v96, %v125
    %127 = vdwg.mxu0
    %128 = vmatpush.msra.mxu0 0.0
    %129 = vmatpush.msra.mxu0 0.0
    %130 = vmatpush.msra.mxu0 0.0
    %131 = vmatpush.msra.mxu0 0.0
    %132 = vmatpush.msra.mxu0 0.0
    %133 = vmatpush.msra.mxu0 0.0
    %134 = vmatpush.msra.mxu0 0.0
    %135 = vmatpush.msra.mxu0 0.0
    %136 = vmatpush.msra.mxu0 0.0
    %137 = vmatpush.msra.mxu0 0.0
    %138 = vmatpush.msra.mxu0 0.0
    %139 = vmatpush.msra.mxu0 0.0
    %140 = vmatpush.msra.mxu0 %v91
    %141 = vmatpush.msra.mxu0 %v87
    %142 = vmatpush.msra.mxu0 %v83
    %143 = vmatpush.msra.mxu0 %v79
    %144 = vmatmul.f32.gmra.mxu0 %v106
    %v145 = vpop.f32.mrf.mxu0
    %v146 = vadd.f32 %v97, %v145
    %147 = vdwg.mxu0
    %148 = vmatpush.msra.mxu0 0.0
    %149 = vmatpush.msra.mxu0 0.0
    %150 = vmatpush.msra.mxu0 0.0
    %151 = vmatpush.msra.mxu0 0.0
    %152 = vmatpush.msra.mxu0 0.0
    %153 = vmatpush.msra.mxu0 0.0
    %154 = vmatpush.msra.mxu0 0.0
    %155 = vmatpush.msra.mxu0 0.0
    %156 = vmatpush.msra.mxu0 0.0
    %157 = vmatpush.msra.mxu0 0.0
    %158 = vmatpush.msra.mxu0 0.0
    %159 = vmatpush.msra.mxu0 0.0
    %160 = vmatpush.msra.mxu0 %v92
    %161 = vmatpush.msra.mxu0 %v88
    %162 = vmatpush.msra.mxu0 %v84
    %163 = vmatpush.msra.mxu0 %v80
    %164 = vmatmul.f32.gmra.mxu0 %v106
    %v165 = vpop.f32.mrf.mxu0
    %v166 = vadd.f32 %v98, %v165
    %167 = vdwg.mxu0
    %168 = vmatpush.msra.mxu0 0.0
    %169 = vmatpush.msra.mxu0 0.0
    %170 = vmatpush.msra.mxu0 0.0
    %171 = vmatpush.msra.mxu0 0.0
    %172 = vmatpush.msra.mxu0 0.0
    %173 = vmatpush.msra.mxu0 0.0
    %174 = vmatpush.msra.mxu0 0.0
    %175 = vmatpush.msra.mxu0 0.0
    %176 = vmatpush.msra.mxu0 0.0
    %177 = vmatpush.msra.mxu0 0.0
    %178 = vmatpush.msra.mxu0 0.0
    %179 = vmatpush.msra.mxu0 0.0
    %180 = vmatpush.msra.mxu0 %v93
    %181 = vmatpush.msra.mxu0 %v89
    %182 = vmatpush.msra.mxu0 %v85
    %183 = vmatpush.msra.mxu0 %v81
    %184 = vmatmul.f32.gmra.mxu0 %v106
    %v185 = vpop.f32.mrf.mxu0
    %v186 = vadd.f32 %v99, %v185
    %187 = vdwg.mxu0
    %v188 = vmul.f32 %v126, %v166
    %v189 = vmul.f32 %v146, %v186
    %v190 = vld [vmem:[#allocation8] sm:$0xff]
    %v191 = vld [vmem:[#allocation8 + $0x8] sm:$0xff]
    %v192 = vld [vmem:[#allocation8 + $0x10] sm:$0xff]
    %v193 = vld [vmem:[#allocation8 + $0x18] sm:$0xff]
    %v194 = vld [vmem:[#allocation8 + $0x20] sm:$0xff]
    %v195 = vld [vmem:[#allocation8 + $0x28] sm:$0xff]
    %v196 = vld [vmem:[#allocation8 + $0x30] sm:$0xff]
    %v197 = vld [vmem:[#allocation8 + $0x38] sm:$0xff]
    %v198 = vld [vmem:[#allocation8 + $0x40] sm:$0xff]
    %v199 = vld [vmem:[#allocation8 + $0x48] sm:$0xff]
    %v200 = vld [vmem:[#allocation8 + $0x50] sm:$0xff]
    %v201 = vld [vmem:[#allocation8 + $0x58] sm:$0xff]
    %v202 = vld [vmem:[#allocation8 + $0x60] sm:$0xff]
    %v203 = vld [vmem:[#allocation8 + $0x68] sm:$0xff]
    %v204 = vld [vmem:[#allocation8 + $0x70] sm:$0xff]
    %v205 = vld [vmem:[#allocation8 + $0x78] sm:$0xff]
    %v206 = vld [vmem:[#allocation8 + $0x80] sm:$0xff]
    %v207 = vld [vmem:[#allocation8 + $0x88] sm:$0xff]
    %v208 = vld [vmem:[#allocation8 + $0x90] sm:$0xff]
    %v209 = vld [vmem:[#allocation8 + $0x98] sm:$0xff]
    %v210 = vld [vmem:[#allocation8 + $0xa0] sm:$0xff]
    %v211 = vld [vmem:[#allocation8 + $0xa8] sm:$0xff]
    %v212 = vld [vmem:[#allocation8 + $0xb0] sm:$0xff]
    %v213 = vld [vmem:[#allocation8 + $0xb8] sm:$0xff]
    %v214 = vld [vmem:[#allocation8 + $0xc0] sm:$0xff]
    %v215 = vld [vmem:[#allocation8 + $0xc8] sm:$0xff]
    %v216 = vld [vmem:[#allocation8 + $0xd0] sm:$0xff]
    %v217 = vld [vmem:[#allocation8 + $0xd8] sm:$0xff]
    %v218 = vld [vmem:[#allocation8 + $0xe0] sm:$0xff]
    %v219 = vld [vmem:[#allocation8 + $0xe8] sm:$0xff]
    %v220 = vld [vmem:[#allocation8 + $0xf0] sm:$0xff]
    %v221 = vld [vmem:[#allocation8 + $0xf8] sm:$0xff]
    %222 = vmatpush.msra.mxu0 %v205
    %223 = vmatpush.msra.mxu0 %v204
    %224 = vmatpush.msra.mxu0 %v203
    %225 = vmatpush.msra.mxu0 %v202
    %226 = vmatpush.msra.mxu0 %v201
    %227 = vmatpush.msra.mxu0 %v200
    %228 = vmatpush.msra.mxu0 %v199
    %229 = vmatpush.msra.mxu0 %v198
    %230 = vmatpush.msra.mxu0 %v197
    %231 = vmatpush.msra.mxu0 %v196
    %232 = vmatpush.msra.mxu0 %v195
    %233 = vmatpush.msra.mxu0 %v194
    %234 = vmatpush.msra.mxu0 %v193
    %235 = vmatpush.msra.mxu0 %v192
    %236 = vmatpush.msra.mxu0 %v191
    %237 = vmatpush.msra.mxu0 %v190
    %238 = vmatmul.f32.gmra.mxu0 %v188
    %v239 = vpop.f32.mrf.mxu0
    %v240 = vadd.f32 0.0, %v239
    %241 = vdwg.mxu0
    %242 = vmatpush.msra.mxu0 %v221
    %243 = vmatpush.msra.mxu0 %v220
    %244 = vmatpush.msra.mxu0 %v219
    %245 = vmatpush.msra.mxu0 %v218
    %246 = vmatpush.msra.mxu0 %v217
    %247 = vmatpush.msra.mxu0 %v216
    %248 = vmatpush.msra.mxu0 %v215
    %249 = vmatpush.msra.mxu0 %v214
    %250 = vmatpush.msra.mxu0 %v213
    %251 = vmatpush.msra.mxu0 %v212
    %252 = vmatpush.msra.mxu0 %v211
    %253 = vmatpush.msra.mxu0 %v210
    %254 = vmatpush.msra.mxu0 %v209
    %255 = vmatpush.msra.mxu0 %v208
    %256 = vmatpush.msra.mxu0 %v207
    %257 = vmatpush.msra.mxu0 %v206
    %258 = vmatmul.f32.gmra.mxu0 %v189
    %v259 = vpop.f32.mrf.mxu0
    %v260 = vadd.f32 %v240, %v259
    %261 = vdwg.mxu0
    %262 = vst [vmem:[#allocation10] sm:$0xff] %v260
    // Predicated region
    $region34: #{tpu_custom_call.1} parent=1 // pred_check
      _
    $region35: #{tpu_custom_call.1} parent=1 // pred_check_branch
      %264 = sbr.rel (0) target = $region37
    $region36: #{tpu_custom_call.1} parent=1 // pred_region
      %266 = vsyncadd [#allocation4], 0
      %s268 = sshll.u32 [#allocation10], 4
      %s269 = int_to_ptr.vmem [resolvable:$true] %s268
      %s270 = sshll.u32 %s4, 4
      %s271 = int_to_ptr.hbm [resolvable:$true] %s270
      %273 = dma.vmem_to_hbm [thread:$0]  %s269, 128, %s271, [#allocation4]
    $region37: #{tpu_custom_call.1} parent=1 // pred_fallthru
      _
    // Predicated region
    $region38: #{tpu_custom_call.1} parent=1 // pred_check
      _
    $region39: #{tpu_custom_call.1} parent=1 // pred_check_branch
      %275 = sbr.rel (0) target = $region41
    $region40: #{tpu_custom_call.1} parent=1 // pred_region
      %277 = dma.done [#allocation4], 128
    $region41: #{tpu_custom_call.1} parent=1 // pred_fallthru
      _
    %278 = vsyncpa [#allocation3], 1
    %279 = vsyncpa [#allocation6], 1
    %280 = vsyncpa [#allocation9], 1
    %281 = vsyncpa [#allocation4], 1

</llo_original>
